<compile_context>
chip_gen: v6e
topology: v6e:2x2x1
jax: 0.10.0
libtpu: 0.0.40
codegen_flags: <defaults>
</compile_context>

<pallas_src>
import functools

import jax
import jax.numpy as jnp
from jax.experimental import pallas as pl
from jax.experimental.pallas import tpu as pltpu

_BN_EPS = 1e-5
_LRELU_SLOPE = 0.2
_VMEM_LIMIT = 32 * 1024 * 1024  # explicit scoped-VMEM budget (safe on v5e/v6e/v7x)


def _leaky_relu(x):
    return jnp.where(x >= 0, x, _LRELU_SLOPE * x)


def _conv1_conv2(x_bf16, w1_ref, b1_ref, w2_ref):
    """conv1 (1x1 + bias) -> LeakyReLU(0.2) -> conv2 (1x1, no bias). f32 result."""
    h1 = jnp.dot(x_bf16, w1_ref[...], preferred_element_type=jnp.float32)
    h1 = _leaky_relu(h1 + b1_ref[...])                              # f32 (tile_p, ndf)
    return jnp.dot(h1.astype(jnp.bfloat16), w2_ref[...],
                   preferred_element_type=jnp.float32)              # f32 (tile_p, 2*ndf)


def _stats_kernel(x_ref, w1_ref, b1_ref, w2_ref, sum_ref, sq_ref, *,
                  tile_p, n_valid):
    """Pass 1: accumulate per-channel sum / sum-of-squares of h2 over all pixels."""
    i = pl.program_id(0)

    @pl.when(i == 0)
    def _():
        sum_ref[...] = jnp.zeros_like(sum_ref)
        sq_ref[...] = jnp.zeros_like(sq_ref)

    h2 = _conv1_conv2(x_ref[...], w1_ref, b1_ref, w2_ref)

    if n_valid % tile_p != 0:  # mask zero-padded pixel rows out of the BN statistics
        row = i * tile_p + jax.lax.broadcasted_iota(jnp.int32, (tile_p, 1), 0)
        h2 = h2 * (row < n_valid).astype(jnp.float32)

    sum_ref[...] += jnp.sum(h2, axis=0, keepdims=True)
    sq_ref[...] += jnp.sum(h2 * h2, axis=0, keepdims=True)


def _output_kernel(x_ref, w1_ref, b1_ref, w2_ref, scale_ref, shift_ref, w3_ref,
                   o_ref):
    """Pass 2: recompute h2, apply folded BN + LeakyReLU, conv3 -> lane-dense row."""
    h2 = _conv1_conv2(x_ref[...], w1_ref, b1_ref, w2_ref)
    h2n = _leaky_relu(h2 * scale_ref[...] + shift_ref[...])
    # conv3 has a single output channel: VPU multiply + lane reduction instead of a
    # degenerate 1-column MXU matmul; written as a lane-dense (1, tile_p) row.
    logit = jnp.sum(h2n * w3_ref[...], axis=-1)                     # (tile_p,)
    o_ref[...] = logit.reshape(1, -1)


def pixel_discriminator(x_nchw, params, *, tile_p=1024):
    """Forward pass of PixelDiscriminator. x_nchw: (N, Cin, H, W) float32."""
    w1, b1, w2, gamma, beta, w3 = params
    N, cin, H, W = x_nchw.shape
    ndf = w1.shape[1]
    c2 = w2.shape[1]
    P = N * H * W

    # Pixel-axis tile: multiple of 128 (lane-dense output rows, MXU-friendly M).
    tile_p = min(tile_p, pl.cdiv(P, 128) * 128)
    tile_p = max(128, (tile_p // 128) * 128)
    num_tiles = pl.cdiv(P, tile_p)
    p_pad = num_tiles * tile_p

    # NCHW -> NHWC -> (P, Cin), fused with the bf16 downcast (halves the copy).
    x = jnp.transpose(x_nchw, (0, 2, 3, 1)).reshape(P, cin).astype(jnp.bfloat16)
    if p_pad != P:
        x = jnp.pad(x, ((0, p_pad - P), (0, 0)))

    # bf16 MXU operands, f32 everywhere else.
    w1b = w1.astype(jnp.bfloat16)
    w2b = w2.astype(jnp.bfloat16)
    b1f = b1.astype(jnp.float32).reshape(1, ndf)
    w3f = w3.astype(jnp.float32).reshape(1, c2)   # row vector for the VPU conv3

    x_spec = pl.BlockSpec((tile_p, cin), lambda i: (i, 0))

    def full_spec(arr):  # small params: whole array resident in VMEM every step
        return pl.BlockSpec(arr.shape, lambda i: (0, 0))

    # ---- pass 1: global BatchNorm statistics --------------------------------
    stats_sum, stats_sq = pl.pallas_call(
        functools.partial(_stats_kernel, tile_p=tile_p, n_valid=P),
        grid=(num_tiles,),
        in_specs=[x_spec, full_spec(w1b), full_spec(b1f), full_spec(w2b)],
        out_specs=[pl.BlockSpec((1, c2), lambda i: (0, 0)),
                   pl.BlockSpec((1, c2), lambda i: (0, 0))],
        out_shape=[jax.ShapeDtypeStruct((1, c2), jnp.float32)] * 2,
        compiler_params=pltpu.CompilerParams(
            dimension_semantics=("arbitrary",),      # cross-tile accumulator
            vmem_limit_bytes=_VMEM_LIMIT),
    )(x, w1b, b1f, w2b)

    # Fold BatchNorm (training-mode batch stats, biased variance, eps=1e-5,
    # affine) into a per-channel scale/shift.  Tiny (1, 2*ndf) math, done once.
    mean = stats_sum / P
    var = jnp.maximum(stats_sq / P - mean * mean, 0.0)
    inv_std = jax.lax.rsqrt(var + _BN_EPS)
    scale = gamma.astype(jnp.float32).reshape(1, c2) * inv_std
    shift = beta.astype(jnp.float32).reshape(1, c2) - mean * scale

    # ---- pass 2: normalize + conv3, lane-dense output -----------------------
    out = pl.pallas_call(
        _output_kernel,
        grid=(num_tiles,),
        in_specs=[x_spec, full_spec(w1b), full_spec(b1f), full_spec(w2b),
                  full_spec(scale), full_spec(shift), full_spec(w3f)],
        out_specs=pl.BlockSpec((1, tile_p), lambda i: (i, 0)),
        out_shape=jax.ShapeDtypeStruct((num_tiles, tile_p), jnp.float32),
        compiler_params=pltpu.CompilerParams(
            dimension_semantics=("parallel",),       # independent tiles -> megacore
            vmem_limit_bytes=_VMEM_LIMIT),
    )(x, w1b, b1f, w2b, scale, shift, w3f)

    # (num_tiles, tile_p) -> (P,) -> (N, H, W, 1) -> (N, 1, H, W)
    out = out.reshape(p_pad)[:P].reshape(N, H, W, 1)
    return jnp.transpose(out, (0, 3, 1, 2))


def init_params(key, input_nc, ndf):
    """Deterministic parameter init (shapes follow the module's __init__).

    Conv weights are stored transposed to (C_in, C_out) so the kernels use them
    directly as matmul RHS; biases / affine params are (1, C).
    """
    k1, k2, k3, k4 = jax.random.split(key, 4)
    w1 = 0.1 * jax.random.normal(k1, (input_nc, ndf), jnp.float32)
    b1 = 0.1 * jax.random.normal(k2, (1, ndf), jnp.float32)
    w2 = 0.1 * jax.random.normal(k3, (ndf, 2 * ndf), jnp.float32)
    gamma = jnp.ones((1, 2 * ndf), jnp.float32)   # BatchNorm2d affine defaults
    beta = jnp.zeros((1, 2 * ndf), jnp.float32)
    w3 = 0.1 * jax.random.normal(k4, (2 * ndf, 1), jnp.float32)
    return (w1, b1, w2, gamma, beta, w3)


def _reference(x_nchw, params):
    """Pure-JAX reference mirroring the kernel's bf16-matmul / f32-math split."""
    w1, b1, w2, gamma, beta, w3 = params
    N, cin, H, W = x_nchw.shape
    x = jnp.transpose(x_nchw, (0, 2, 3, 1)).reshape(-1, cin).astype(jnp.bfloat16)
    h1 = jnp.dot(x, w1.astype(jnp.bfloat16), preferred_element_type=jnp.float32) + b1
    h1 = jnp.where(h1 >= 0, h1, _LRELU_SLOPE * h1)
    h2 = jnp.dot(h1.astype(jnp.bfloat16), w2.astype(jnp.bfloat16),
                 preferred_element_type=jnp.float32)
    mean = jnp.mean(h2, axis=0, keepdims=True)
    var = jnp.mean(jnp.square(h2 - mean), axis=0, keepdims=True)
    h2n = (h2 - mean) * jax.lax.rsqrt(var + _BN_EPS) * gamma + beta
    h2n = jnp.where(h2n >= 0, h2n, _LRELU_SLOPE * h2n)
    o = jnp.dot(h2n, w3)
    return jnp.transpose(o.reshape(N, H, W, 1), (0, 3, 1, 2))


if __name__ == "__main__":
    key = jax.random.PRNGKey(0)
    kx, kp = jax.random.split(key)

    N, input_nc, Hs, Ws = 2, 4, 16, 16
    ndf = 8

    x = jax.random.normal(kx, (N, input_nc, Hs, Ws), jnp.float32)
    params = init_params(kp, input_nc, ndf)

    # tile_p=256 -> 2 pixel tiles: exercises the grid, the cross-tile BN
    # accumulator, and the lane-dense per-tile output rows.
    y = pixel_discriminator(x, params, tile_p=256)
    jax.block_until_ready(y)

    assert y.shape == (N, 1, Hs, Ws), y.shape
    assert y.dtype == jnp.float32
    assert bool(jnp.all(jnp.isfinite(y)))

    y_ref = _reference(x, params)
    max_err = float(jnp.max(jnp.abs(y - y_ref)))
    assert max_err < 1e-2, f"max abs error vs reference: {max_err}"

    print("KERNEL_OK")
</pallas_src>

<mosaic_0001>
module attributes {stable_mosaic.version = 11 : i64} {
  func.func @_stats_kernel(%arg0: i32, %arg1: memref<256x4xbf16, #tpu.memory_space<vmem>>, %arg2: memref<4x8xbf16, #tpu.memory_space<vmem>>, %arg3: memref<1x8xf32, #tpu.memory_space<vmem>>, %arg4: memref<8x16xbf16, #tpu.memory_space<vmem>>, %arg5: memref<1x16xf32, #tpu.memory_space<vmem>>, %arg6: memref<1x16xf32, #tpu.memory_space<vmem>>) attributes {dimension_semantics = [#tpu.dimension_semantics<arbitrary>], iteration_bounds = array<i64: 2>, scalar_prefetch = 0 : i64, scratch_operands = 0 : i64, tpu.core_type = #tpu.core_type<tc>, window_params = [{transform_indices = @transform_0, window_bounds = array<i64: 256, 4>}, {pipeline_mode = #tpu.pipeline_mode<synchronous>, transform_indices = @transform_1, window_bounds = array<i64: 4, 8>}, {pipeline_mode = #tpu.pipeline_mode<synchronous>, transform_indices = @transform_2, window_bounds = array<i64: 1, 8>}, {pipeline_mode = #tpu.pipeline_mode<synchronous>, transform_indices = @transform_3, window_bounds = array<i64: 8, 16>}, {pipeline_mode = #tpu.pipeline_mode<synchronous>, transform_indices = @transform_4, window_bounds = array<i64: 1, 16>}, {pipeline_mode = #tpu.pipeline_mode<synchronous>, transform_indices = @transform_5, window_bounds = array<i64: 1, 16>}]} {
    %c0_i32 = arith.constant 0 : i32
    %0 = arith.cmpi eq, %arg0, %c0_i32 : i32
    %1 = arith.extui %0 : i1 to i32
    %c0_i32_0 = arith.constant 0 : i32
    %2 = arith.cmpi ne, %1, %c0_i32_0 : i32
    scf.if %2 {
      %cst_21 = arith.constant 0.000000e+00 : f32
      %28 = vector.broadcast %cst_21 : f32 to vector<1x16xf32>
      %c0_22 = arith.constant 0 : index
      %c0_23 = arith.constant 0 : index
      %29 = vector.load %arg5[%c0_22, %c0_23] : memref<1x16xf32, #tpu.memory_space<vmem>>, vector<1x16xf32>
      tpu.vector_store %arg5[%c0_22, %c0_23], %28 {strides = array<i32>} : memref<1x16xf32, #tpu.memory_space<vmem>>, vector<1x16xf32>,
      %cst_24 = arith.constant 0.000000e+00 : f32
      %30 = vector.broadcast %cst_24 : f32 to vector<1x16xf32>
      %c0_25 = arith.constant 0 : index
      %c0_26 = arith.constant 0 : index
      %31 = vector.load %arg6[%c0_25, %c0_26] : memref<1x16xf32, #tpu.memory_space<vmem>>, vector<1x16xf32>
      tpu.vector_store %arg6[%c0_25, %c0_26], %30 {strides = array<i32>} : memref<1x16xf32, #tpu.memory_space<vmem>>, vector<1x16xf32>,
    } else {
    }
    %c0 = arith.constant 0 : index
    %c0_1 = arith.constant 0 : index
    %3 = vector.load %arg1[%c0, %c0_1] : memref<256x4xbf16, #tpu.memory_space<vmem>>, vector<256x4xbf16>
    %c0_2 = arith.constant 0 : index
    %c0_3 = arith.constant 0 : index
    %4 = vector.load %arg2[%c0_2, %c0_3] : memref<4x8xbf16, #tpu.memory_space<vmem>>, vector<4x8xbf16>
    %cst = arith.constant dense<0.000000e+00> : vector<256x8xf32>
    %5 = tpu.matmul %3, %4, %cst {dimension_numbers = #tpu.dot_dimension_numbers<[1], [0], [0], [1], [0, 0, 1, 1], [], []>} : vector<256x4xbf16>, vector<4x8xbf16>, vector<256x8xf32> -> vector<256x8xf32>
    %c0_4 = arith.constant 0 : index
    %c0_5 = arith.constant 0 : index
    %6 = vector.load %arg3[%c0_4, %c0_5] : memref<1x8xf32, #tpu.memory_space<vmem>>, vector<1x8xf32>
    %7 = vector.broadcast %6 : vector<1x8xf32> to vector<256x8xf32>
    %8 = arith.addf %5, %7 : vector<256x8xf32>
    %cst_6 = arith.constant 0.000000e+00 : f32
    %9 = vector.broadcast %cst_6 : f32 to vector<256x8xf32>
    %10 = arith.cmpf oge, %8, %9 : vector<256x8xf32>
    %cst_7 = arith.constant 2.000000e-01 : f32
    %11 = vector.broadcast %cst_7 : f32 to vector<256x8xf32>
    %12 = arith.mulf %11, %8 : vector<256x8xf32>
    %13 = arith.select %10, %8, %12 : vector<256x8xi1>, vector<256x8xf32>
    %14 = arith.truncf %13 : vector<256x8xf32> to vector<256x8xbf16>
    %c0_8 = arith.constant 0 : index
    %c0_9 = arith.constant 0 : index
    %15 = vector.load %arg4[%c0_8, %c0_9] : memref<8x16xbf16, #tpu.memory_space<vmem>>, vector<8x16xbf16>
    %cst_10 = arith.constant dense<0.000000e+00> : vector<256x16xf32>
    %16 = tpu.matmul %14, %15, %cst_10 {dimension_numbers = #tpu.dot_dimension_numbers<[1], [0], [0], [1], [0, 0, 1, 1], [], []>} : vector<256x8xbf16>, vector<8x16xbf16>, vector<256x16xf32> -> vector<256x16xf32>
    %c0_11 = arith.constant 0 : index
    %c0_12 = arith.constant 0 : index
    %17 = vector.load %arg5[%c0_11, %c0_12] : memref<1x16xf32, #tpu.memory_space<vmem>>, vector<1x16xf32>
    %cst_13 = arith.constant dense<0.000000e+00> : vector<16xf32>
    %18 = vector.multi_reduction <add>, %16, %cst_13 [0] : vector<256x16xf32> to vector<16xf32>
    %19 = vector.shape_cast %18 : vector<16xf32> to vector<1x16xf32>
    %20 = arith.addf %17, %19 : vector<1x16xf32>
    %c0_14 = arith.constant 0 : index
    %c0_15 = arith.constant 0 : index
    %21 = vector.load %arg5[%c0_14, %c0_15] : memref<1x16xf32, #tpu.memory_space<vmem>>, vector<1x16xf32>
    tpu.vector_store %arg5[%c0_14, %c0_15], %20 {strides = array<i32>} : memref<1x16xf32, #tpu.memory_space<vmem>>, vector<1x16xf32>,
    %c0_16 = arith.constant 0 : index
    %c0_17 = arith.constant 0 : index
    %22 = vector.load %arg6[%c0_16, %c0_17] : memref<1x16xf32, #tpu.memory_space<vmem>>, vector<1x16xf32>
    %23 = arith.mulf %16, %16 : vector<256x16xf32>
    %cst_18 = arith.constant dense<0.000000e+00> : vector<16xf32>
    %24 = vector.multi_reduction <add>, %23, %cst_18 [0] : vector<256x16xf32> to vector<16xf32>
    %25 = vector.shape_cast %24 : vector<16xf32> to vector<1x16xf32>
    %26 = arith.addf %22, %25 : vector<1x16xf32>
    %c0_19 = arith.constant 0 : index
    %c0_20 = arith.constant 0 : index
    %27 = vector.load %arg6[%c0_19, %c0_20] : memref<1x16xf32, #tpu.memory_space<vmem>>, vector<1x16xf32>
    tpu.vector_store %arg6[%c0_19, %c0_20], %26 {strides = array<i32>} : memref<1x16xf32, #tpu.memory_space<vmem>>, vector<1x16xf32>,
    return
  }
  func.func @transform_0(%arg0: i32) -> (i32, i32) {
    %c0_i32 = arith.constant 0 : i32
    %c0_i32_0 = arith.constant 0 : i32
    return %arg0, %c0_i32 : i32, i32
  }
  func.func @transform_1(%arg0: i32) -> (i32, i32) {
    %c0_i32 = arith.constant 0 : i32
    %c0_i32_0 = arith.constant 0 : i32
    %c0_i32_1 = arith.constant 0 : i32
    return %c0_i32, %c0_i32_0 : i32, i32
  }
  func.func @transform_2(%arg0: i32) -> (i32, i32) {
    %c0_i32 = arith.constant 0 : i32
    %c0_i32_0 = arith.constant 0 : i32
    %c0_i32_1 = arith.constant 0 : i32
    return %c0_i32, %c0_i32_0 : i32, i32
  }
  func.func @transform_3(%arg0: i32) -> (i32, i32) {
    %c0_i32 = arith.constant 0 : i32
    %c0_i32_0 = arith.constant 0 : i32
    %c0_i32_1 = arith.constant 0 : i32
    return %c0_i32, %c0_i32_0 : i32, i32
  }
  func.func @transform_4(%arg0: i32) -> (i32, i32) {
    %c0_i32 = arith.constant 0 : i32
    %c0_i32_0 = arith.constant 0 : i32
    %c0_i32_1 = arith.constant 0 : i32
    return %c0_i32, %c0_i32_0 : i32, i32
  }
  func.func @transform_5(%arg0: i32) -> (i32, i32) {
    %c0_i32 = arith.constant 0 : i32
    %c0_i32_0 = arith.constant 0 : i32
    %c0_i32_1 = arith.constant 0 : i32
    return %c0_i32, %c0_i32_0 : i32, i32
  }
}

</mosaic_0001>

<llo_original>
// kernel: tpu_custom_call.1
$region0: #{tpu_custom_call.1}
  #allocation0 [shape = 'u32[]', space=smem, size = 0x4, offset = 0x4, fixed_abs, tag = 'smem constant byte address 0x4 - core index']
  #allocation1 [shape = 'u32[144,128]{1,0:T(1,128)}', space=vmem, size = 0x12000, scoped, tag = 'internal scratch']
  %s0 = inlined_call_operand.vmem [shape: bf16[512,4], index: 0, kind: input, shape index: {}]
  %s1 = inlined_call_operand.vmem [shape: bf16[4,8], index: 1, kind: input, shape index: {}]
  %s2 = inlined_call_operand.vmem [shape: f32[1,8], index: 2, kind: input, shape index: {}]
  %s3 = inlined_call_operand.vmem [shape: bf16[8,16], index: 3, kind: input, shape index: {}]
  %s4 = inlined_call_operand.hbm [shape: f32[1,16], index: 4, kind: output, shape index: {0}]
  %s5 = inlined_call_operand.hbm [shape: f32[1,16], index: 5, kind: output, shape index: {1}]
  %6 = xla_tuple %s4, %s5
  %s7 = sld [smem:[#allocation0]]
  $region61: #{tpu_custom_call.1} parent=0
    _
  %s9 = ssub.s32 1, %s7
  %s10 = scalar_select 0, %s9, %s7
  $region1: #{tpu_custom_call.1} parent=0
    #allocation2 [shape = 'u8[512]{0}', space=vmem, size = 0x400, scoped, tag = 'output window, operand 0, single buffered']
    #allocation3 [shape = 's32[2]{0}', space=sflag, size = 0x8, scoped, tag = 'scoped memory for tpu_custom_call.1']
    #allocation4 [shape = 'u8[512]{0}', space=vmem, size = 0x400, scoped, tag = 'output window, operand 1, single buffered']
    #allocation5 [shape = 's32[1]{0}', space=sflag, size = 0x4, scoped, tag = 'scoped memory for tpu_custom_call.1']
    %11 = vsyncpa [#allocation3], 0
    %12 = vsyncpa [#allocation5], 0
    loop: start=0, step=1, limit=4
    $region2: #{tpu_custom_call.1} parent=1 // loop_pre_header
      _
    $region3: #{tpu_custom_call.1} parent=1 // loop_header
      %s14 = sphi 0, %s18
      %p15 = scmp.ge.s32.totalorder %s14, 4
      %s24 = sphi 0, %s26
      %s27 = sphi 0, %s24
      %s28 = sphi 0, %s27
      %s44 = sphi 0, %s28
      %s48 = sphi 0, %s48
      %s50 = sphi 0, %s48
      %s51 = sphi 0, %s50
      %s65 = sphi 0, %s51
      %s69 = sphi 0, %s69
      %s71 = sphi 0, %s69
      %s72 = sphi 0, %s71
      %s86 = sphi 0, %s72
      %s90 = sphi 0, %s90
      %s92 = sphi 0, %s90
      %s93 = sphi 0, %s92
      %s107 = sphi 0, %s93
      %s111 = sphi 0, %s111
      %s113 = sphi 0, %s111
      %s114 = sphi 0, %s113
      %s128 = sphi 0, %s114
      %s132 = sphi 0, %s132
      %s134 = sphi 0, %s132
      %s135 = sphi 0, %s134
      %s149 = sphi 0, %s135
    $region4: #{tpu_custom_call.1} parent=1 // loop_header_branch
      %17 = sbr.rel (%p15) target = $region8
    $region5: #{tpu_custom_call.1} parent=1 // loop_body
      %s19 = ssub.s32 %s14, 1
      %s20 = ssub.s32 %s14, 2
      %s21 = sadd.s32 %s14, 1
      %s22 = ssub.s32 %s14, %s21
      %p23 = scmp.eq.s32.totalorder %s22, 0
      %s25 = sadd.s32 %s24, 1
      %s26 = scalar_select %p23, %s24, %s25
      %p29 = pneg %p23
      %p30 = scmp.eq.s32.totalorder %s14, 1
      %p31 = por %p29, %p30
      %p32 = scmp.ne.s32.totalorder %s24, %s27
      %p33 = scmp.eq.s32.totalorder %s14, 0
      %p34 = por %p32, %p33
      %p35 = scmp.ne.s32.totalorder %s24, %s27
      %p36 = scmp.eq.s32.totalorder %s19, 1
      %p37 = por %p35, %p36
      %p38 = scmp.ne.s32.totalorder %s27, %s28
      %p39 = scmp.eq.s32.totalorder %s19, 0
      %p40 = por %p38, %p39
      %p41 = scmp.ne.s32.totalorder %s27, %s28
      %p42 = scmp.eq.s32.totalorder %s20, 1
      %p43 = por %p41, %p42
      %p45 = scmp.ne.s32.totalorder %s28, %s44
      %p46 = scmp.eq.s32.totalorder %s20, 0
      %p47 = por %p45, %p46
      %s49 = sadd.s32 %s48, 1
      %p52 = scmp.eq.s32.totalorder %s14, 1
      %p53 = scmp.ne.s32.totalorder %s48, %s50
      %p54 = scmp.eq.s32.totalorder %s14, 0
      %p55 = por %p53, %p54
      %p56 = scmp.ne.s32.totalorder %s48, %s50
      %p57 = scmp.eq.s32.totalorder %s19, 1
      %p58 = por %p56, %p57
      %p59 = scmp.ne.s32.totalorder %s50, %s51
      %p60 = scmp.eq.s32.totalorder %s19, 0
      %p61 = por %p59, %p60
      %p62 = scmp.ne.s32.totalorder %s50, %s51
      %p63 = scmp.eq.s32.totalorder %s20, 1
      %p64 = por %p62, %p63
      %p66 = scmp.ne.s32.totalorder %s51, %s65
      %p67 = scmp.eq.s32.totalorder %s20, 0
      %p68 = por %p66, %p67
      %s70 = sadd.s32 %s69, 1
      %p73 = scmp.eq.s32.totalorder %s14, 1
      %p74 = scmp.ne.s32.totalorder %s69, %s71
      %p75 = scmp.eq.s32.totalorder %s14, 0
      %p76 = por %p74, %p75
      %p77 = scmp.ne.s32.totalorder %s69, %s71
      %p78 = scmp.eq.s32.totalorder %s19, 1
      %p79 = por %p77, %p78
      %p80 = scmp.ne.s32.totalorder %s71, %s72
      %p81 = scmp.eq.s32.totalorder %s19, 0
      %p82 = por %p80, %p81
      %p83 = scmp.ne.s32.totalorder %s71, %s72
      %p84 = scmp.eq.s32.totalorder %s20, 1
      %p85 = por %p83, %p84
      %p87 = scmp.ne.s32.totalorder %s72, %s86
      %p88 = scmp.eq.s32.totalorder %s20, 0
      %p89 = por %p87, %p88
      %s91 = sadd.s32 %s90, 1
      %p94 = scmp.eq.s32.totalorder %s14, 1
      %p95 = scmp.ne.s32.totalorder %s90, %s92
      %p96 = scmp.eq.s32.totalorder %s14, 0
      %p97 = por %p95, %p96
      %p98 = scmp.ne.s32.totalorder %s90, %s92
      %p99 = scmp.eq.s32.totalorder %s19, 1
      %p100 = por %p98, %p99
      %p101 = scmp.ne.s32.totalorder %s92, %s93
      %p102 = scmp.eq.s32.totalorder %s19, 0
      %p103 = por %p101, %p102
      %p104 = scmp.ne.s32.totalorder %s92, %s93
      %p105 = scmp.eq.s32.totalorder %s20, 1
      %p106 = por %p104, %p105
      %p108 = scmp.ne.s32.totalorder %s93, %s107
      %p109 = scmp.eq.s32.totalorder %s20, 0
      %p110 = por %p108, %p109
      %s112 = sadd.s32 %s111, 1
      %p115 = scmp.eq.s32.totalorder %s14, 1
      %p116 = scmp.ne.s32.totalorder %s111, %s113
      %p117 = scmp.eq.s32.totalorder %s14, 0
      %p118 = por %p116, %p117
      %p119 = scmp.ne.s32.totalorder %s111, %s113
      %p120 = scmp.eq.s32.totalorder %s19, 1
      %p121 = por %p119, %p120
      %p122 = scmp.ne.s32.totalorder %s113, %s114
      %p123 = scmp.eq.s32.totalorder %s19, 0
      %p124 = por %p122, %p123
      %p125 = scmp.ne.s32.totalorder %s113, %s114
      %p126 = scmp.eq.s32.totalorder %s20, 1
      %p127 = por %p125, %p126
      %p129 = scmp.ne.s32.totalorder %s114, %s128
      %p130 = scmp.eq.s32.totalorder %s20, 0
      %p131 = por %p129, %p130
      %s133 = sadd.s32 %s132, 1
      %p136 = scmp.eq.s32.totalorder %s14, 1
      %p137 = scmp.ne.s32.totalorder %s132, %s134
      %p138 = scmp.eq.s32.totalorder %s14, 0
      %p139 = por %p137, %p138
      %p140 = scmp.ne.s32.totalorder %s132, %s134
      %p141 = scmp.eq.s32.totalorder %s19, 1
      %p142 = por %p140, %p141
      %p143 = scmp.ne.s32.totalorder %s134, %s135
      %p144 = scmp.eq.s32.totalorder %s19, 0
      %p145 = por %p143, %p144
      %p146 = scmp.ne.s32.totalorder %s134, %s135
      %p147 = scmp.eq.s32.totalorder %s20, 1
      %p148 = por %p146, %p147
      %p150 = scmp.ne.s32.totalorder %s135, %s149
      %p151 = scmp.eq.s32.totalorder %s20, 0
      %p152 = por %p150, %p151
      %p153 = scmp.le.s32.totalorder 1, %s14
      %p154 = scmp.lt.s32.totalorder %s14, 3
      %p155 = pnand %p153, %p154
      %p156 = pneg %p155
      // Predicated region
      $region9: #{tpu_custom_call.1} parent=5 // pred_check
        _
      $region10: #{tpu_custom_call.1} parent=5 // pred_check_branch
        %158 = sbr.rel (%p155) target = $region12
      $region11: #{tpu_custom_call.1} parent=5 // pred_region
        %s159 = ssub.s32 %s14, 1
        // Predicated region
        $region13: #{tpu_custom_call.1} parent=11 // pred_check
          %p160 = pneg %p61
        $region14: #{tpu_custom_call.1} parent=11 // pred_check_branch
          %162 = sbr.rel (%p160) target = $region16
        $region15: #{tpu_custom_call.1} parent=11 // pred_region
          _
        $region16: #{tpu_custom_call.1} parent=11 // pred_fallthru
          _
        // Predicated region
        $region17: #{tpu_custom_call.1} parent=11 // pred_check
          %p163 = pneg %p82
        $region18: #{tpu_custom_call.1} parent=11 // pred_check_branch
          %165 = sbr.rel (%p163) target = $region20
        $region19: #{tpu_custom_call.1} parent=11 // pred_region
          _
        $region20: #{tpu_custom_call.1} parent=11 // pred_fallthru
          _
        // Predicated region
        $region21: #{tpu_custom_call.1} parent=11 // pred_check
          %p166 = pneg %p103
        $region22: #{tpu_custom_call.1} parent=11 // pred_check_branch
          %168 = sbr.rel (%p166) target = $region24
        $region23: #{tpu_custom_call.1} parent=11 // pred_region
          _
        $region24: #{tpu_custom_call.1} parent=11 // pred_fallthru
          _
      $region12: #{tpu_custom_call.1} parent=5 // pred_fallthru
        _
      %p169 = scmp.lt.s32.totalorder %s14, 2
      // Predicated region
      $region25: #{tpu_custom_call.1} parent=5 // pred_check
        %p170 = pneg %p169
      $region26: #{tpu_custom_call.1} parent=5 // pred_check_branch
        %172 = sbr.rel (%p170) target = $region28
      $region27: #{tpu_custom_call.1} parent=5 // pred_region
        // Predicated region
        $region29: #{tpu_custom_call.1} parent=27 // pred_check
          %p173 = pneg %p34
        $region30: #{tpu_custom_call.1} parent=27 // pred_check_branch
          %175 = sbr.rel (%p173) target = $region32
        $region31: #{tpu_custom_call.1} parent=27 // pred_region
          %s176 = smul.u32 32, %s14
          %p177 = scmp.lt.s32.totalorder %s176, 63
          %s178 = scalar_select %p177, %s176, 63
          %s179 = smul.addr %s178, 4
          %s180 = scalar_lea.vmem %s0, %s179
          %s181 = smul.u32 32, %s14
        $region32: #{tpu_custom_call.1} parent=27 // pred_fallthru
          _
      $region28: #{tpu_custom_call.1} parent=5 // pred_fallthru
        _
      %p182 = scmp.le.s32.totalorder 1, %s14
      %p183 = scmp.lt.s32.totalorder %s14, 3
      %p184 = pnand %p182, %p183
      %p185 = pneg %p184
      // Predicated region
      $region33: #{tpu_custom_call.1} parent=5 // pred_check
        _
      $region34: #{tpu_custom_call.1} parent=5 // pred_check_branch
        %187 = sbr.rel (%p184) target = $region36
      $region35: #{tpu_custom_call.1} parent=5 // pred_region
        %s188 = ssub.s32 %s14, 1
        %s189 = smul.u32 32, %s19
        %p190 = scmp.lt.s32.totalorder %s189, 63
        %s191 = scalar_select %p190, %s189, 63
        %s192 = smul.addr %s191, 4
        %s193 = scalar_lea.vmem %s0, %s192
        %p194 = pneg %p40
        %p195 = pneg %p37
        %p196 = pneg %p61
        %p197 = pneg %p58
        %p198 = pneg %p82
        %p199 = pneg %p79
        %p200 = pneg %p103
        %p201 = pneg %p100
        %p202 = pneg %p124
        %p203 = pneg %p121
        %p204 = pneg %p145
        %p205 = pneg %p142
        %s206 = smul.u32 32, %s19
        %p207 = scmp.lt.s32.totalorder %s206, 63
        %s208 = scalar_select %p207, %s206, 63
        %s209 = smul.addr %s208, 4
        %s210 = scalar_lea.vmem %s0, %s209
        %s211 = smul.u32 32, %s19
        %p213 = scmp.eq.s32.totalorder %s19, 0
        // Predicated region
        $region37: #{tpu_custom_call.1} parent=35 // pred_check
          %p214 = pneg %p213
        $region38: #{tpu_custom_call.1} parent=35 // pred_check_branch
          %216 = sbr.rel (%p214) target = $region40
        $region39: #{tpu_custom_call.1} parent=35 // pred_region
          %vm217 = vcmask 122880
          %218 = vst.msk [vmem:[#allocation2] sm:$0x1] %vm217, 0.0
          %219 = vst.msk [vmem:[#allocation4] sm:$0x1] %vm217, 0.0
        $region40: #{tpu_custom_call.1} parent=35 // pred_fallthru
          _
        %v220 = vld [vmem:[%s210] sm:$0xf]
        %v221 = vld [vmem:[%s210 + $0x4] sm:$0xf]
        %v222 = vld [vmem:[%s210 + $0x8] sm:$0xf]
        %v223 = vld [vmem:[%s210 + $0xc] sm:$0xf]
        %v224 = vld [vmem:[%s210 + $0x10] sm:$0xf]
        %v225 = vld [vmem:[%s210 + $0x14] sm:$0xf]
        %v226 = vld [vmem:[%s210 + $0x18] sm:$0xf]
        %v227 = vld [vmem:[%s210 + $0x1c] sm:$0xf]
        %v228 = vld [vmem:[%s210 + $0x20] sm:$0xf]
        %v229 = vld [vmem:[%s210 + $0x24] sm:$0xf]
        %v230 = vld [vmem:[%s210 + $0x28] sm:$0xf]
        %v231 = vld [vmem:[%s210 + $0x2c] sm:$0xf]
        %v232 = vld [vmem:[%s210 + $0x30] sm:$0xf]
        %v233 = vld [vmem:[%s210 + $0x34] sm:$0xf]
        %v234 = vld [vmem:[%s210 + $0x38] sm:$0xf]
        %v235 = vld [vmem:[%s210 + $0x3c] sm:$0xf]
        %v236 = vld [vmem:[%s210 + $0x40] sm:$0xf]
        %v237 = vld [vmem:[%s210 + $0x44] sm:$0xf]
        %v238 = vld [vmem:[%s210 + $0x48] sm:$0xf]
        %v239 = vld [vmem:[%s210 + $0x4c] sm:$0xf]
        %v240 = vld [vmem:[%s210 + $0x50] sm:$0xf]
        %v241 = vld [vmem:[%s210 + $0x54] sm:$0xf]
        %v242 = vld [vmem:[%s210 + $0x58] sm:$0xf]
        %v243 = vld [vmem:[%s210 + $0x5c] sm:$0xf]
        %v244 = vld [vmem:[%s210 + $0x60] sm:$0xf]
        %v245 = vld [vmem:[%s210 + $0x64] sm:$0xf]
        %v246 = vld [vmem:[%s210 + $0x68] sm:$0xf]
        %v247 = vld [vmem:[%s210 + $0x6c] sm:$0xf]
        %v248 = vld [vmem:[%s210 + $0x70] sm:$0xf]
        %v249 = vld [vmem:[%s210 + $0x74] sm:$0xf]
        %v250 = vld [vmem:[%s210 + $0x78] sm:$0xf]
        %v251 = vld [vmem:[%s210 + $0x7c] sm:$0xf]
        %v252 = vld [vmem:[%s1] sm:$0x3]
        %v253 = vld [vmem:[%s2] sm:$0x1]
        %v255 = vlaneseq
        %v256 = vshrl.u32 %v255, 7
        %v257 = vsub.s32 0, %v256
        %v258 = vrot.slane %v253, %v257
        %v292 = vunpack.c.l.b16 %v220
        %v293 = vunpack.c.l.b16 %v221
        %v294 = vunpack.c.l.b16 %v222
        %v295 = vunpack.c.l.b16 %v223
        %v296 = vunpack.c.l.b16 %v224
        %v297 = vunpack.c.l.b16 %v225
        %v298 = vunpack.c.l.b16 %v226
        %v299 = vunpack.c.l.b16 %v227
        %v300 = vunpack.c.l.b16 %v228
        %v301 = vunpack.c.l.b16 %v229
        %v302 = vunpack.c.l.b16 %v230
        %v303 = vunpack.c.l.b16 %v231
        %v304 = vunpack.c.l.b16 %v232
        %v305 = vunpack.c.l.b16 %v233
        %v306 = vunpack.c.l.b16 %v234
        %v307 = vunpack.c.l.b16 %v235
        %v308 = vunpack.c.l.b16 %v236
        %v309 = vunpack.c.l.b16 %v237
        %v310 = vunpack.c.l.b16 %v238
        %v311 = vunpack.c.l.b16 %v239
        %v312 = vunpack.c.l.b16 %v240
        %v313 = vunpack.c.l.b16 %v241
        %v314 = vunpack.c.l.b16 %v242
        %v315 = vunpack.c.l.b16 %v243
        %v316 = vunpack.c.l.b16 %v244
        %v317 = vunpack.c.l.b16 %v245
        %v318 = vunpack.c.l.b16 %v246
        %v319 = vunpack.c.l.b16 %v247
        %v320 = vunpack.c.l.b16 %v248
        %v321 = vunpack.c.l.b16 %v249
        %v322 = vunpack.c.l.b16 %v250
        %v323 = vunpack.c.l.b16 %v251
        %v324 = vpack.c.b16 %v293, %v292
        %v325 = vpack.c.b16 %v295, %v294
        %v326 = vpack.c.b16 %v297, %v296
        %v327 = vpack.c.b16 %v299, %v298
        %v328 = vpack.c.b16 %v301, %v300
        %v329 = vpack.c.b16 %v303, %v302
        %v330 = vpack.c.b16 %v305, %v304
        %v331 = vpack.c.b16 %v307, %v306
        %v332 = vpack.c.b16 %v309, %v308
        %v333 = vpack.c.b16 %v311, %v310
        %v334 = vpack.c.b16 %v313, %v312
        %v335 = vpack.c.b16 %v315, %v314
        %v336 = vpack.c.b16 %v317, %v316
        %v337 = vpack.c.b16 %v319, %v318
        %v338 = vpack.c.b16 %v321, %v320
        %v339 = vpack.c.b16 %v323, %v322
        %vm340 = vcmask 31744
        %v342 = vsel %vm340, %v324, 0
        %v345 = vsel %vm340, %v325, 0
        %v348 = vsel %vm340, %v326, 0
        %v351 = vsel %vm340, %v327, 0
        %v354 = vsel %vm340, %v328, 0
        %v357 = vsel %vm340, %v329, 0
        %v360 = vsel %vm340, %v330, 0
        %v363 = vsel %vm340, %v331, 0
        %v366 = vsel %vm340, %v332, 0
        %v369 = vsel %vm340, %v333, 0
        %v372 = vsel %vm340, %v334, 0
        %v375 = vsel %vm340, %v335, 0
        %v378 = vsel %vm340, %v336, 0
        %v381 = vsel %vm340, %v337, 0
        %v384 = vsel %vm340, %v338, 0
        %v387 = vsel %vm340, %v339, 0
        %vm389 = vcmask 1041408
        %v391 = vsel %vm389, %v252, 0
        %393 = vmatprep.subr.bf16.mxu0 0
        %394 = vmatpush1.bf16.msra.mxu0 0
        %395 = vmatprep.subr.bf16.mxu0 0
        %396 = vmatpush1.bf16.msra.mxu0 0
        %397 = vmatprep.subr.bf16.mxu0 0
        %398 = vmatpush1.bf16.msra.mxu0 0
        %399 = vmatprep.subr.bf16.mxu0 0
        %400 = vmatpush1.bf16.msra.mxu0 0
        %401 = vmatprep.subr.bf16.mxu0 0
        %402 = vmatpush1.bf16.msra.mxu0 0
        %403 = vmatprep.subr.bf16.mxu0 0
        %404 = vmatpush1.bf16.msra.mxu0 0
        %405 = vmatprep.subr.bf16.mxu0 0
        %406 = vmatpush1.bf16.msra.mxu0 0
        %407 = vmatprep.subr.bf16.mxu0 0
        %408 = vmatpush1.bf16.msra.mxu0 %v391
        %409 = vmatprep.subr.bf16.mxu0 0
        %410 = vmatpush2.bf16.msra.mxu0 0
        %411 = vmatprep.subr.bf16.mxu0 0
        %412 = vmatpush2.bf16.msra.mxu0 0
        %413 = vmatprep.subr.bf16.mxu0 0
        %414 = vmatpush2.bf16.msra.mxu0 0
        %415 = vmatprep.subr.bf16.mxu0 0
        %416 = vmatpush2.bf16.msra.mxu0 0
        %417 = vmatprep.subr.bf16.mxu0 0
        %418 = vmatpush2.bf16.msra.mxu0 0
        %419 = vmatprep.subr.bf16.mxu0 0
        %420 = vmatpush2.bf16.msra.mxu0 0
        %421 = vmatprep.subr.bf16.mxu0 0
        %422 = vmatpush2.bf16.msra.mxu0 0
        %423 = vmatprep.subr.bf16.mxu0 0
        %424 = vmatpush2.bf16.msra.mxu0 0
        %425 = vmatprep.mubr.bf16.mxu0 0
        %426 = vmatmul.mubr.bf16.gmra.mxu0 %v342
        %v427 = vpop.f32.mrf.mxu0
        %v428 = vadd.f32 %v258, %v427
        %v429 = vpop.f32.mrf.mxu0
        %v430 = vpop.f32.mrf.mxu0
        %v431 = vadd.f32 %v258, %v430
        %v432 = vpop.f32.mrf.mxu0
        %433 = vmatprep.mubr.bf16.mxu0 0
        %434 = vmatmul.mubr.bf16.gmra.mxu0 %v345
        %v435 = vpop.f32.mrf.mxu0
        %v436 = vadd.f32 %v258, %v435
        %v437 = vpop.f32.mrf.mxu0
        %v438 = vpop.f32.mrf.mxu0
        %v439 = vadd.f32 %v258, %v438
        %v440 = vpop.f32.mrf.mxu0
        %441 = vmatprep.mubr.bf16.mxu0 0
        %442 = vmatmul.mubr.bf16.gmra.mxu0 %v348
        %v443 = vpop.f32.mrf.mxu0
        %v444 = vadd.f32 %v258, %v443
        %v445 = vpop.f32.mrf.mxu0
        %v446 = vpop.f32.mrf.mxu0
        %v447 = vadd.f32 %v258, %v446
        %v448 = vpop.f32.mrf.mxu0
        %449 = vmatprep.mubr.bf16.mxu0 0
        %450 = vmatmul.mubr.bf16.gmra.mxu0 %v351
        %v451 = vpop.f32.mrf.mxu0
        %v452 = vadd.f32 %v258, %v451
        %v453 = vpop.f32.mrf.mxu0
        %v454 = vpop.f32.mrf.mxu0
        %v455 = vadd.f32 %v258, %v454
        %v456 = vpop.f32.mrf.mxu0
        %457 = vmatprep.mubr.bf16.mxu0 0
        %458 = vmatmul.mubr.bf16.gmra.mxu0 %v354
        %v459 = vpop.f32.mrf.mxu0
        %v460 = vadd.f32 %v258, %v459
        %v461 = vpop.f32.mrf.mxu0
        %v462 = vpop.f32.mrf.mxu0
        %v463 = vadd.f32 %v258, %v462
        %v464 = vpop.f32.mrf.mxu0
        %465 = vmatprep.mubr.bf16.mxu0 0
        %466 = vmatmul.mubr.bf16.gmra.mxu0 %v357
        %v467 = vpop.f32.mrf.mxu0
        %v468 = vadd.f32 %v258, %v467
        %v469 = vpop.f32.mrf.mxu0
        %v470 = vpop.f32.mrf.mxu0
        %v471 = vadd.f32 %v258, %v470
        %v472 = vpop.f32.mrf.mxu0
        %473 = vmatprep.mubr.bf16.mxu0 0
        %474 = vmatmul.mubr.bf16.gmra.mxu0 %v360
        %v475 = vpop.f32.mrf.mxu0
        %v476 = vadd.f32 %v258, %v475
        %v477 = vpop.f32.mrf.mxu0
        %v478 = vpop.f32.mrf.mxu0
        %v479 = vadd.f32 %v258, %v478
        %v480 = vpop.f32.mrf.mxu0
        %481 = vmatprep.mubr.bf16.mxu0 0
        %482 = vmatmul.mubr.bf16.gmra.mxu0 %v363
        %v483 = vpop.f32.mrf.mxu0
        %v484 = vadd.f32 %v258, %v483
        %v485 = vpop.f32.mrf.mxu0
        %v486 = vpop.f32.mrf.mxu0
        %v487 = vadd.f32 %v258, %v486
        %v488 = vpop.f32.mrf.mxu0
        %489 = vmatprep.mubr.bf16.mxu0 0
        %490 = vmatmul.mubr.bf16.gmra.mxu0 %v366
        %v491 = vpop.f32.mrf.mxu0
        %v492 = vadd.f32 %v258, %v491
        %v493 = vpop.f32.mrf.mxu0
        %v494 = vpop.f32.mrf.mxu0
        %v495 = vadd.f32 %v258, %v494
        %v496 = vpop.f32.mrf.mxu0
        %497 = vmatprep.mubr.bf16.mxu0 0
        %498 = vmatmul.mubr.bf16.gmra.mxu0 %v369
        %v499 = vpop.f32.mrf.mxu0
        %v500 = vadd.f32 %v258, %v499
        %v501 = vpop.f32.mrf.mxu0
        %v502 = vpop.f32.mrf.mxu0
        %v503 = vadd.f32 %v258, %v502
        %v504 = vpop.f32.mrf.mxu0
        %505 = vmatprep.mubr.bf16.mxu0 0
        %506 = vmatmul.mubr.bf16.gmra.mxu0 %v372
        %v507 = vpop.f32.mrf.mxu0
        %v508 = vadd.f32 %v258, %v507
        %v509 = vpop.f32.mrf.mxu0
        %v510 = vpop.f32.mrf.mxu0
        %v511 = vadd.f32 %v258, %v510
        %v512 = vpop.f32.mrf.mxu0
        %513 = vmatprep.mubr.bf16.mxu0 0
        %514 = vmatmul.mubr.bf16.gmra.mxu0 %v375
        %v515 = vpop.f32.mrf.mxu0
        %v516 = vadd.f32 %v258, %v515
        %v517 = vpop.f32.mrf.mxu0
        %v518 = vpop.f32.mrf.mxu0
        %v519 = vadd.f32 %v258, %v518
        %v520 = vpop.f32.mrf.mxu0
        %521 = vmatprep.mubr.bf16.mxu0 0
        %522 = vmatmul.mubr.bf16.gmra.mxu0 %v378
        %v523 = vpop.f32.mrf.mxu0
        %v524 = vadd.f32 %v258, %v523
        %v525 = vpop.f32.mrf.mxu0
        %v526 = vpop.f32.mrf.mxu0
        %v527 = vadd.f32 %v258, %v526
        %v528 = vpop.f32.mrf.mxu0
        %529 = vmatprep.mubr.bf16.mxu0 0
        %530 = vmatmul.mubr.bf16.gmra.mxu0 %v381
        %v531 = vpop.f32.mrf.mxu0
        %v532 = vadd.f32 %v258, %v531
        %v533 = vpop.f32.mrf.mxu0
        %v534 = vpop.f32.mrf.mxu0
        %v535 = vadd.f32 %v258, %v534
        %v536 = vpop.f32.mrf.mxu0
        %537 = vmatprep.mubr.bf16.mxu0 0
        %538 = vmatmul.mubr.bf16.gmra.mxu0 %v384
        %v539 = vpop.f32.mrf.mxu0
        %v540 = vadd.f32 %v258, %v539
        %v541 = vpop.f32.mrf.mxu0
        %v542 = vpop.f32.mrf.mxu0
        %v543 = vadd.f32 %v258, %v542
        %v544 = vpop.f32.mrf.mxu0
        %545 = vmatprep.mubr.bf16.mxu0 0
        %546 = vmatmul.mubr.bf16.gmra.mxu0 %v387
        %v547 = vpop.f32.mrf.mxu0
        %v548 = vadd.f32 %v258, %v547
        %v549 = vpop.f32.mrf.mxu0
        %v550 = vpop.f32.mrf.mxu0
        %v551 = vadd.f32 %v258, %v550
        %v552 = vpop.f32.mrf.mxu0
        %553 = vdwg.mxu0
        %vm554 = vcmp.ge.f32.partialorder %v428, 0.0
        %vm555 = vcmp.ge.f32.partialorder %v431, 0.0
        %vm556 = vcmp.ge.f32.partialorder %v436, 0.0
        %vm557 = vcmp.ge.f32.partialorder %v439, 0.0
        %vm558 = vcmp.ge.f32.partialorder %v444, 0.0
        %vm559 = vcmp.ge.f32.partialorder %v447, 0.0
        %vm560 = vcmp.ge.f32.partialorder %v452, 0.0
        %vm561 = vcmp.ge.f32.partialorder %v455, 0.0
        %vm562 = vcmp.ge.f32.partialorder %v460, 0.0
        %vm563 = vcmp.ge.f32.partialorder %v463, 0.0
        %vm564 = vcmp.ge.f32.partialorder %v468, 0.0
        %vm565 = vcmp.ge.f32.partialorder %v471, 0.0
        %vm566 = vcmp.ge.f32.partialorder %v476, 0.0
        %vm567 = vcmp.ge.f32.partialorder %v479, 0.0
        %vm568 = vcmp.ge.f32.partialorder %v484, 0.0
        %vm569 = vcmp.ge.f32.partialorder %v487, 0.0
        %vm570 = vcmp.ge.f32.partialorder %v492, 0.0
        %vm571 = vcmp.ge.f32.partialorder %v495, 0.0
        %vm572 = vcmp.ge.f32.partialorder %v500, 0.0
        %vm573 = vcmp.ge.f32.partialorder %v503, 0.0
        %vm574 = vcmp.ge.f32.partialorder %v508, 0.0
        %vm575 = vcmp.ge.f32.partialorder %v511, 0.0
        %vm576 = vcmp.ge.f32.partialorder %v516, 0.0
        %vm577 = vcmp.ge.f32.partialorder %v519, 0.0
        %vm578 = vcmp.ge.f32.partialorder %v524, 0.0
        %vm579 = vcmp.ge.f32.partialorder %v527, 0.0
        %vm580 = vcmp.ge.f32.partialorder %v532, 0.0
        %vm581 = vcmp.ge.f32.partialorder %v535, 0.0
        %vm582 = vcmp.ge.f32.partialorder %v540, 0.0
        %vm583 = vcmp.ge.f32.partialorder %v543, 0.0
        %vm584 = vcmp.ge.f32.partialorder %v548, 0.0
        %vm585 = vcmp.ge.f32.partialorder %v551, 0.0
        %v586 = vmul.f32 %v428, 0.2
        %v587 = vmul.f32 %v431, 0.2
        %v588 = vmul.f32 %v436, 0.2
        %v589 = vmul.f32 %v439, 0.2
        %v590 = vmul.f32 %v444, 0.2
        %v591 = vmul.f32 %v447, 0.2
        %v592 = vmul.f32 %v452, 0.2
        %v593 = vmul.f32 %v455, 0.2
        %v594 = vmul.f32 %v460, 0.2
        %v595 = vmul.f32 %v463, 0.2
        %v596 = vmul.f32 %v468, 0.2
        %v597 = vmul.f32 %v471, 0.2
        %v598 = vmul.f32 %v476, 0.2
        %v599 = vmul.f32 %v479, 0.2
        %v600 = vmul.f32 %v484, 0.2
        %v601 = vmul.f32 %v487, 0.2
        %v602 = vmul.f32 %v492, 0.2
        %v603 = vmul.f32 %v495, 0.2
        %v604 = vmul.f32 %v500, 0.2
        %v605 = vmul.f32 %v503, 0.2
        %v606 = vmul.f32 %v508, 0.2
        %v607 = vmul.f32 %v511, 0.2
        %v608 = vmul.f32 %v516, 0.2
        %v609 = vmul.f32 %v519, 0.2
        %v610 = vmul.f32 %v524, 0.2
        %v611 = vmul.f32 %v527, 0.2
        %v612 = vmul.f32 %v532, 0.2
        %v613 = vmul.f32 %v535, 0.2
        %v614 = vmul.f32 %v540, 0.2
        %v615 = vmul.f32 %v543, 0.2
        %v616 = vmul.f32 %v548, 0.2
        %v617 = vmul.f32 %v551, 0.2
        %v618 = vsel %vm554, %v428, %v586
        %v619 = vsel %vm555, %v431, %v587
        %v620 = vsel %vm556, %v436, %v588
        %v621 = vsel %vm557, %v439, %v589
        %v622 = vsel %vm558, %v444, %v590
        %v623 = vsel %vm559, %v447, %v591
        %v624 = vsel %vm560, %v452, %v592
        %v625 = vsel %vm561, %v455, %v593
        %v626 = vsel %vm562, %v460, %v594
        %v627 = vsel %vm563, %v463, %v595
        %v628 = vsel %vm564, %v468, %v596
        %v629 = vsel %vm565, %v471, %v597
        %v630 = vsel %vm566, %v476, %v598
        %v631 = vsel %vm567, %v479, %v599
        %v632 = vsel %vm568, %v484, %v600
        %v633 = vsel %vm569, %v487, %v601
        %v634 = vsel %vm570, %v492, %v602
        %v635 = vsel %vm571, %v495, %v603
        %v636 = vsel %vm572, %v500, %v604
        %v637 = vsel %vm573, %v503, %v605
        %v638 = vsel %vm574, %v508, %v606
        %v639 = vsel %vm575, %v511, %v607
        %v640 = vsel %vm576, %v516, %v608
        %v641 = vsel %vm577, %v519, %v609
        %v642 = vsel %vm578, %v524, %v610
        %v643 = vsel %vm579, %v527, %v611
        %v644 = vsel %vm580, %v532, %v612
        %v645 = vsel %vm581, %v535, %v613
        %v646 = vsel %vm582, %v540, %v614
        %v647 = vsel %vm583, %v543, %v615
        %v648 = vsel %vm584, %v548, %v616
        %v649 = vsel %vm585, %v551, %v617
        %v650 = vpack.c.bf16 %v619, %v618
        %v651 = vpack.c.bf16 %v621, %v620
        %v652 = vpack.c.bf16 %v623, %v622
        %v653 = vpack.c.bf16 %v625, %v624
        %v654 = vpack.c.bf16 %v627, %v626
        %v655 = vpack.c.bf16 %v629, %v628
        %v656 = vpack.c.bf16 %v631, %v630
        %v657 = vpack.c.bf16 %v633, %v632
        %v658 = vpack.c.bf16 %v635, %v634
        %v659 = vpack.c.bf16 %v637, %v636
        %v660 = vpack.c.bf16 %v639, %v638
        %v661 = vpack.c.bf16 %v641, %v640
        %v662 = vpack.c.bf16 %v643, %v642
        %v663 = vpack.c.bf16 %v645, %v644
        %v664 = vpack.c.bf16 %v647, %v646
        %v665 = vpack.c.bf16 %v649, %v648
        %v666 = vld [vmem:[%s3] sm:$0xf]
        %vm667 = vcmask 64512
        %v669 = vsel %vm667, %v650, 0
        %v672 = vsel %vm667, %v651, 0
        %v675 = vsel %vm667, %v652, 0
        %v678 = vsel %vm667, %v653, 0
        %v681 = vsel %vm667, %v654, 0
        %v684 = vsel %vm667, %v655, 0
        %v687 = vsel %vm667, %v656, 0
        %v690 = vsel %vm667, %v657, 0
        %v693 = vsel %vm667, %v658, 0
        %v696 = vsel %vm667, %v659, 0
        %v699 = vsel %vm667, %v660, 0
        %v702 = vsel %vm667, %v661, 0
        %v705 = vsel %vm667, %v662, 0
        %v708 = vsel %vm667, %v663, 0
        %v711 = vsel %vm667, %v664, 0
        %v714 = vsel %vm667, %v665, 0
        %vm716 = vcmask 1043456
        %v718 = vsel %vm716, %v666, 0
        %720 = vmatprep.subr.bf16.mxu0 0
        %721 = vmatpush1.bf16.msra.mxu0 0
        %722 = vmatprep.subr.bf16.mxu0 0
        %723 = vmatpush1.bf16.msra.mxu0 0
        %724 = vmatprep.subr.bf16.mxu0 0
        %725 = vmatpush1.bf16.msra.mxu0 0
        %726 = vmatprep.subr.bf16.mxu0 0
        %727 = vmatpush1.bf16.msra.mxu0 0
        %728 = vmatprep.subr.bf16.mxu0 0
        %729 = vmatpush1.bf16.msra.mxu0 0
        %730 = vmatprep.subr.bf16.mxu0 0
        %731 = vmatpush1.bf16.msra.mxu0 0
        %732 = vmatprep.subr.bf16.mxu0 0
        %733 = vmatpush1.bf16.msra.mxu0 0
        %734 = vmatprep.subr.bf16.mxu0 0
        %735 = vmatpush1.bf16.msra.mxu0 %v718
        %736 = vmatprep.subr.bf16.mxu0 0
        %737 = vmatpush2.bf16.msra.mxu0 0
        %738 = vmatprep.subr.bf16.mxu0 0
        %739 = vmatpush2.bf16.msra.mxu0 0
        %740 = vmatprep.subr.bf16.mxu0 0
        %741 = vmatpush2.bf16.msra.mxu0 0
        %742 = vmatprep.subr.bf16.mxu0 0
        %743 = vmatpush2.bf16.msra.mxu0 0
        %744 = vmatprep.subr.bf16.mxu0 0
        %745 = vmatpush2.bf16.msra.mxu0 0
        %746 = vmatprep.subr.bf16.mxu0 0
        %747 = vmatpush2.bf16.msra.mxu0 0
        %748 = vmatprep.subr.bf16.mxu0 0
        %749 = vmatpush2.bf16.msra.mxu0 0
        %750 = vmatprep.subr.bf16.mxu0 0
        %751 = vmatpush2.bf16.msra.mxu0 0
        %752 = vmatprep.mubr.bf16.mxu0 0
        %753 = vmatmul.mubr.bf16.gmra.mxu0 %v669
        %v754 = vpop.f32.mrf.mxu0
        %v755 = vadd.f32 0.0, %v754
        %v756 = vpop.f32.mrf.mxu0
        %v757 = vpop.f32.mrf.mxu0
        %v758 = vadd.f32 0.0, %v757
        %v759 = vpop.f32.mrf.mxu0
        %760 = vmatprep.mubr.bf16.mxu0 0
        %761 = vmatmul.mubr.bf16.gmra.mxu0 %v672
        %v762 = vpop.f32.mrf.mxu0
        %v763 = vadd.f32 0.0, %v762
        %v764 = vpop.f32.mrf.mxu0
        %v765 = vpop.f32.mrf.mxu0
        %v766 = vadd.f32 0.0, %v765
        %v767 = vpop.f32.mrf.mxu0
        %768 = vmatprep.mubr.bf16.mxu0 0
        %769 = vmatmul.mubr.bf16.gmra.mxu0 %v675
        %v770 = vpop.f32.mrf.mxu0
        %v771 = vadd.f32 0.0, %v770
        %v772 = vpop.f32.mrf.mxu0
        %v773 = vpop.f32.mrf.mxu0
        %v774 = vadd.f32 0.0, %v773
        %v775 = vpop.f32.mrf.mxu0
        %776 = vmatprep.mubr.bf16.mxu0 0
        %777 = vmatmul.mubr.bf16.gmra.mxu0 %v678
        %v778 = vpop.f32.mrf.mxu0
        %v779 = vadd.f32 0.0, %v778
        %v780 = vpop.f32.mrf.mxu0
        %v781 = vpop.f32.mrf.mxu0
        %v782 = vadd.f32 0.0, %v781
        %v783 = vpop.f32.mrf.mxu0
        %784 = vmatprep.mubr.bf16.mxu0 0
        %785 = vmatmul.mubr.bf16.gmra.mxu0 %v681
        %v786 = vpop.f32.mrf.mxu0
        %v787 = vadd.f32 0.0, %v786
        %v788 = vpop.f32.mrf.mxu0
        %v789 = vpop.f32.mrf.mxu0
        %v790 = vadd.f32 0.0, %v789
        %v791 = vpop.f32.mrf.mxu0
        %792 = vmatprep.mubr.bf16.mxu0 0
        %793 = vmatmul.mubr.bf16.gmra.mxu0 %v684
        %v794 = vpop.f32.mrf.mxu0
        %v795 = vadd.f32 0.0, %v794
        %v796 = vpop.f32.mrf.mxu0
        %v797 = vpop.f32.mrf.mxu0
        %v798 = vadd.f32 0.0, %v797
        %v799 = vpop.f32.mrf.mxu0
        %800 = vmatprep.mubr.bf16.mxu0 0
        %801 = vmatmul.mubr.bf16.gmra.mxu0 %v687
        %v802 = vpop.f32.mrf.mxu0
        %v803 = vadd.f32 0.0, %v802
        %v804 = vpop.f32.mrf.mxu0
        %v805 = vpop.f32.mrf.mxu0
        %v806 = vadd.f32 0.0, %v805
        %v807 = vpop.f32.mrf.mxu0
        %808 = vmatprep.mubr.bf16.mxu0 0
        %809 = vmatmul.mubr.bf16.gmra.mxu0 %v690
        %v810 = vpop.f32.mrf.mxu0
        %v811 = vadd.f32 0.0, %v810
        %v812 = vpop.f32.mrf.mxu0
        %v813 = vpop.f32.mrf.mxu0
        %v814 = vadd.f32 0.0, %v813
        %v815 = vpop.f32.mrf.mxu0
        %816 = vmatprep.mubr.bf16.mxu0 0
        %817 = vmatmul.mubr.bf16.gmra.mxu0 %v693
        %v818 = vpop.f32.mrf.mxu0
        %v819 = vadd.f32 0.0, %v818
        %v820 = vpop.f32.mrf.mxu0
        %v821 = vpop.f32.mrf.mxu0
        %v822 = vadd.f32 0.0, %v821
        %v823 = vpop.f32.mrf.mxu0
        %824 = vmatprep.mubr.bf16.mxu0 0
        %825 = vmatmul.mubr.bf16.gmra.mxu0 %v696
        %v826 = vpop.f32.mrf.mxu0
        %v827 = vadd.f32 0.0, %v826
        %v828 = vpop.f32.mrf.mxu0
        %v829 = vpop.f32.mrf.mxu0
        %v830 = vadd.f32 0.0, %v829
        %v831 = vpop.f32.mrf.mxu0
        %832 = vmatprep.mubr.bf16.mxu0 0
        %833 = vmatmul.mubr.bf16.gmra.mxu0 %v699
        %v834 = vpop.f32.mrf.mxu0
        %v835 = vadd.f32 0.0, %v834
        %v836 = vpop.f32.mrf.mxu0
        %v837 = vpop.f32.mrf.mxu0
        %v838 = vadd.f32 0.0, %v837
        %v839 = vpop.f32.mrf.mxu0
        %840 = vmatprep.mubr.bf16.mxu0 0
        %841 = vmatmul.mubr.bf16.gmra.mxu0 %v702
        %v842 = vpop.f32.mrf.mxu0
        %v843 = vadd.f32 0.0, %v842
        %v844 = vpop.f32.mrf.mxu0
        %v845 = vpop.f32.mrf.mxu0
        %v846 = vadd.f32 0.0, %v845
        %v847 = vpop.f32.mrf.mxu0
        %848 = vmatprep.mubr.bf16.mxu0 0
        %849 = vmatmul.mubr.bf16.gmra.mxu0 %v705
        %v850 = vpop.f32.mrf.mxu0
        %v851 = vadd.f32 0.0, %v850
        %v852 = vpop.f32.mrf.mxu0
        %v853 = vpop.f32.mrf.mxu0
        %v854 = vadd.f32 0.0, %v853
        %v855 = vpop.f32.mrf.mxu0
        %856 = vmatprep.mubr.bf16.mxu0 0
        %857 = vmatmul.mubr.bf16.gmra.mxu0 %v708
        %v858 = vpop.f32.mrf.mxu0
        %v859 = vadd.f32 0.0, %v858
        %v860 = vpop.f32.mrf.mxu0
        %v861 = vpop.f32.mrf.mxu0
        %v862 = vadd.f32 0.0, %v861
        %v863 = vpop.f32.mrf.mxu0
        %864 = vmatprep.mubr.bf16.mxu0 0
        %865 = vmatmul.mubr.bf16.gmra.mxu0 %v711
        %v866 = vpop.f32.mrf.mxu0
        %v867 = vadd.f32 0.0, %v866
        %v868 = vpop.f32.mrf.mxu0
        %v869 = vpop.f32.mrf.mxu0
        %v870 = vadd.f32 0.0, %v869
        %v871 = vpop.f32.mrf.mxu0
        %872 = vmatprep.mubr.bf16.mxu0 0
        %873 = vmatmul.mubr.bf16.gmra.mxu0 %v714
        %v874 = vpop.f32.mrf.mxu0
        %v875 = vadd.f32 0.0, %v874
        %v876 = vpop.f32.mrf.mxu0
        %v877 = vpop.f32.mrf.mxu0
        %v878 = vadd.f32 0.0, %v877
        %v879 = vpop.f32.mrf.mxu0
        %880 = vdwg.mxu0
        %v881 = vld [vmem:[#allocation2] sm:$0x1]
        %vm882 = vcmask 130048
        %v883 = vsel %vm882, %v755, 0.0
        %v884 = vsel %vm882, %v758, 0.0
        %v885 = vadd.f32 %v883, %v884
        %v886 = vsel %vm882, %v763, 0.0
        %v887 = vadd.f32 %v885, %v886
        %v888 = vsel %vm882, %v766, 0.0
        %v889 = vadd.f32 %v887, %v888
        %v890 = vsel %vm882, %v771, 0.0
        %v891 = vadd.f32 %v889, %v890
        %v892 = vsel %vm882, %v774, 0.0
        %v893 = vadd.f32 %v891, %v892
        %v894 = vsel %vm882, %v779, 0.0
        %v895 = vadd.f32 %v893, %v894
        %v896 = vsel %vm882, %v782, 0.0
        %v897 = vadd.f32 %v895, %v896
        %v898 = vsel %vm882, %v787, 0.0
        %v899 = vadd.f32 %v897, %v898
        %v900 = vsel %vm882, %v790, 0.0
        %v901 = vadd.f32 %v899, %v900
        %v902 = vsel %vm882, %v795, 0.0
        %v903 = vadd.f32 %v901, %v902
        %v904 = vsel %vm882, %v798, 0.0
        %v905 = vadd.f32 %v903, %v904
        %v906 = vsel %vm882, %v803, 0.0
        %v907 = vadd.f32 %v905, %v906
        %v908 = vsel %vm882, %v806, 0.0
        %v909 = vadd.f32 %v907, %v908
        %v910 = vsel %vm882, %v811, 0.0
        %v911 = vadd.f32 %v909, %v910
        %v912 = vsel %vm882, %v814, 0.0
        %v913 = vadd.f32 %v911, %v912
        %v914 = vsel %vm882, %v819, 0.0
        %v915 = vadd.f32 %v913, %v914
        %v916 = vsel %vm882, %v822, 0.0
        %v917 = vadd.f32 %v915, %v916
        %v918 = vsel %vm882, %v827, 0.0
        %v919 = vadd.f32 %v917, %v918
        %v920 = vsel %vm882, %v830, 0.0
        %v921 = vadd.f32 %v919, %v920
        %v922 = vsel %vm882, %v835, 0.0
        %v923 = vadd.f32 %v921, %v922
        %v924 = vsel %vm882, %v838, 0.0
        %v925 = vadd.f32 %v923, %v924
        %v926 = vsel %vm882, %v843, 0.0
        %v927 = vadd.f32 %v925, %v926
        %v928 = vsel %vm882, %v846, 0.0
        %v929 = vadd.f32 %v927, %v928
        %v930 = vsel %vm882, %v851, 0.0
        %v931 = vadd.f32 %v929, %v930
        %v932 = vsel %vm882, %v854, 0.0
        %v933 = vadd.f32 %v931, %v932
        %v934 = vsel %vm882, %v859, 0.0
        %v935 = vadd.f32 %v933, %v934
        %v936 = vsel %vm882, %v862, 0.0
        %v937 = vadd.f32 %v935, %v936
        %v938 = vsel %vm882, %v867, 0.0
        %v939 = vadd.f32 %v937, %v938
        %v940 = vsel %vm882, %v870, 0.0
        %v941 = vadd.f32 %v939, %v940
        %v942 = vsel %vm882, %v875, 0.0
        %v943 = vadd.f32 %v941, %v942
        %v944 = vsel %vm882, %v878, 0.0
        %v945 = vadd.f32 %v943, %v944
        %v946 = vrot.slane %v945, 4
        %v947 = vadd.f32 %v945, %v946
        %v948 = vrot.slane %v947, 2
        %v949 = vadd.f32 %v947, %v948
        %v950 = vrot.slane %v949, 1
        %v951 = vadd.f32 %v949, %v950
        %v952 = vadd.f32 %v881, %v951
        %vm953 = vcmask 122880
        %954 = vst.msk [vmem:[#allocation2] sm:$0x1] %vm953, %v952
        %v955 = vld [vmem:[#allocation4] sm:$0x1]
        %v956 = vmul.f32 %v755, %v755
        %v957 = vmul.f32 %v758, %v758
        %v958 = vmul.f32 %v763, %v763
        %v959 = vmul.f32 %v766, %v766
        %v960 = vmul.f32 %v771, %v771
        %v961 = vmul.f32 %v774, %v774
        %v962 = vmul.f32 %v779, %v779
        %v963 = vmul.f32 %v782, %v782
        %v964 = vmul.f32 %v787, %v787
        %v965 = vmul.f32 %v790, %v790
        %v966 = vmul.f32 %v795, %v795
        %v967 = vmul.f32 %v798, %v798
        %v968 = vmul.f32 %v803, %v803
        %v969 = vmul.f32 %v806, %v806
        %v970 = vmul.f32 %v811, %v811
        %v971 = vmul.f32 %v814, %v814
        %v972 = vmul.f32 %v819, %v819
        %v973 = vmul.f32 %v822, %v822
        %v974 = vmul.f32 %v827, %v827
        %v975 = vmul.f32 %v830, %v830
        %v976 = vmul.f32 %v835, %v835
        %v977 = vmul.f32 %v838, %v838
        %v978 = vmul.f32 %v843, %v843
        %v979 = vmul.f32 %v846, %v846
        %v980 = vmul.f32 %v851, %v851
        %v981 = vmul.f32 %v854, %v854
        %v982 = vmul.f32 %v859, %v859
        %v983 = vmul.f32 %v862, %v862
        %v984 = vmul.f32 %v867, %v867
        %v985 = vmul.f32 %v870, %v870
        %v986 = vmul.f32 %v875, %v875
        %v987 = vmul.f32 %v878, %v878
        %v988 = vsel %vm882, %v956, 0.0
        %v989 = vsel %vm882, %v957, 0.0
        %v990 = vadd.f32 %v988, %v989
        %v991 = vsel %vm882, %v958, 0.0
        %v992 = vadd.f32 %v990, %v991
        %v993 = vsel %vm882, %v959, 0.0
        %v994 = vadd.f32 %v992, %v993
        %v995 = vsel %vm882, %v960, 0.0
        %v996 = vadd.f32 %v994, %v995
        %v997 = vsel %vm882, %v961, 0.0
        %v998 = vadd.f32 %v996, %v997
        %v999 = vsel %vm882, %v962, 0.0
        %v1000 = vadd.f32 %v998, %v999
        %v1001 = vsel %vm882, %v963, 0.0
        %v1002 = vadd.f32 %v1000, %v1001
        %v1003 = vsel %vm882, %v964, 0.0
        %v1004 = vadd.f32 %v1002, %v1003
        %v1005 = vsel %vm882, %v965, 0.0
        %v1006 = vadd.f32 %v1004, %v1005
        %v1007 = vsel %vm882, %v966, 0.0
        %v1008 = vadd.f32 %v1006, %v1007
        %v1009 = vsel %vm882, %v967, 0.0
        %v1010 = vadd.f32 %v1008, %v1009
        %v1011 = vsel %vm882, %v968, 0.0
        %v1012 = vadd.f32 %v1010, %v1011
        %v1013 = vsel %vm882, %v969, 0.0
        %v1014 = vadd.f32 %v1012, %v1013
        %v1015 = vsel %vm882, %v970, 0.0
        %v1016 = vadd.f32 %v1014, %v1015
        %v1017 = vsel %vm882, %v971, 0.0
        %v1018 = vadd.f32 %v1016, %v1017
        %v1019 = vsel %vm882, %v972, 0.0
        %v1020 = vadd.f32 %v1018, %v1019
        %v1021 = vsel %vm882, %v973, 0.0
        %v1022 = vadd.f32 %v1020, %v1021
        %v1023 = vsel %vm882, %v974, 0.0
        %v1024 = vadd.f32 %v1022, %v1023
        %v1025 = vsel %vm882, %v975, 0.0
        %v1026 = vadd.f32 %v1024, %v1025
        %v1027 = vsel %vm882, %v976, 0.0
        %v1028 = vadd.f32 %v1026, %v1027
        %v1029 = vsel %vm882, %v977, 0.0
        %v1030 = vadd.f32 %v1028, %v1029
        %v1031 = vsel %vm882, %v978, 0.0
        %v1032 = vadd.f32 %v1030, %v1031
        %v1033 = vsel %vm882, %v979, 0.0
        %v1034 = vadd.f32 %v1032, %v1033
        %v1035 = vsel %vm882, %v980, 0.0
        %v1036 = vadd.f32 %v1034, %v1035
        %v1037 = vsel %vm882, %v981, 0.0
        %v1038 = vadd.f32 %v1036, %v1037
        %v1039 = vsel %vm882, %v982, 0.0
        %v1040 = vadd.f32 %v1038, %v1039
        %v1041 = vsel %vm882, %v983, 0.0
        %v1042 = vadd.f32 %v1040, %v1041
        %v1043 = vsel %vm882, %v984, 0.0
        %v1044 = vadd.f32 %v1042, %v1043
        %v1045 = vsel %vm882, %v985, 0.0
        %v1046 = vadd.f32 %v1044, %v1045
        %v1047 = vsel %vm882, %v986, 0.0
        %v1048 = vadd.f32 %v1046, %v1047
        %v1049 = vsel %vm882, %v987, 0.0
        %v1050 = vadd.f32 %v1048, %v1049
        %v1051 = vrot.slane %v1050, 4
        %v1052 = vadd.f32 %v1050, %v1051
        %v1053 = vrot.slane %v1052, 2
        %v1054 = vadd.f32 %v1052, %v1053
        %v1055 = vrot.slane %v1054, 1
        %v1056 = vadd.f32 %v1054, %v1055
        %v1057 = vadd.f32 %v955, %v1056
        %1058 = vst.msk [vmem:[#allocation4] sm:$0x1] %vm953, %v1057
        // Predicated region
        $region41: #{tpu_custom_call.1} parent=35 // pred_check
          %p1059 = pneg %p121
        $region42: #{tpu_custom_call.1} parent=35 // pred_check_branch
          %1061 = sbr.rel (%p1059) target = $region44
        $region43: #{tpu_custom_call.1} parent=35 // pred_region
          %s1063 = ssub.s32 16, 16
          %1064 = vsyncadd [#allocation3], %s1063
          %s1066 = sshll.u32 [#allocation2], 4
          %s1067 = int_to_ptr.vmem [resolvable:$true] %s1066
          %1069 = dma.vmem_to_hbm [thread:$0]  %s1067, 16, %s4, [#allocation3]
        $region44: #{tpu_custom_call.1} parent=35 // pred_fallthru
          _
        // Predicated region
        $region45: #{tpu_custom_call.1} parent=35 // pred_check
          %p1070 = pneg %p142
        $region46: #{tpu_custom_call.1} parent=35 // pred_check_branch
          %1072 = sbr.rel (%p1070) target = $region48
        $region47: #{tpu_custom_call.1} parent=35 // pred_region
          %s1074 = ssub.s32 16, 16
          %1075 = vsyncadd [#allocation5], %s1074
          %s1077 = sshll.u32 [#allocation4], 4
          %s1078 = int_to_ptr.vmem [resolvable:$true] %s1077
          %1080 = dma.vmem_to_hbm [thread:$0]  %s1078, 16, %s5, [#allocation5]
        $region48: #{tpu_custom_call.1} parent=35 // pred_fallthru
          _
        // Predicated region
        $region49: #{tpu_custom_call.1} parent=35 // pred_check
          %p1081 = pneg %p121
        $region50: #{tpu_custom_call.1} parent=35 // pred_check_branch
          %1083 = sbr.rel (%p1081) target = $region52
        $region51: #{tpu_custom_call.1} parent=35 // pred_region
          %1084 = dma.done [#allocation3], 16
        $region52: #{tpu_custom_call.1} parent=35 // pred_fallthru
          _
        // Predicated region
        $region53: #{tpu_custom_call.1} parent=35 // pred_check
          %p1085 = pneg %p142
        $region54: #{tpu_custom_call.1} parent=35 // pred_check_branch
          %1087 = sbr.rel (%p1085) target = $region56
        $region55: #{tpu_custom_call.1} parent=35 // pred_region
          %1088 = dma.done [#allocation5], 16
        $region56: #{tpu_custom_call.1} parent=35 // pred_fallthru
          _
      $region36: #{tpu_custom_call.1} parent=5 // pred_fallthru
        _
      %p1089 = scmp.le.s32.totalorder 2, %s14
      // Predicated region
      $region57: #{tpu_custom_call.1} parent=5 // pred_check
        %p1090 = pneg %p1089
      $region58: #{tpu_custom_call.1} parent=5 // pred_check_branch
        %1092 = sbr.rel (%p1090) target = $region60
      $region59: #{tpu_custom_call.1} parent=5 // pred_region
        %s1093 = ssub.s32 %s14, 2
      $region60: #{tpu_custom_call.1} parent=5 // pred_fallthru
        _
    $region6: #{tpu_custom_call.1} parent=1 // loop_footer
      %s18 = sadd.s32 1, %s14
    $region7: #{tpu_custom_call.1} parent=1 // loop_footer_branch
      %13 = sbr.rel target = $region3
    $region8: #{tpu_custom_call.1} parent=1 // loop_exit
      _
    %1094 = vsyncpa [#allocation3], 1
    %s1095 = scalar_lea.sflag [#allocation3], 1
    %1096 = vsyncpa %s1095, 1
    %1097 = vsyncpa [#allocation5], 1

</llo_original>
